<compile_context>
chip_gen: v7x
topology: tpu7x:2x2x1
jax: 0.10.0
libtpu: 0.0.40
codegen_flags: <defaults>
</compile_context>

<pallas_src>
import numpy as np
import jax
import jax.numpy as jnp
from jax.experimental import pallas as pl
from jax.experimental.pallas import tpu as pltpu

EMBED_DIM = 32
INPUT_IMAGE_SIZE = (16, 16, 16)      # (H, W, D)
IMAGE_EMBEDDING_SIZE = (8, 8, 8)     # unused by forward(); kept for fidelity

ROW_WIDTH = 128                       # lane-dense per-row operand width
TEXT_COL = 64                         # text payload lives at cols [64, 64+E)
TEXT_LABEL = 4.0                      # internal label code for "text row"

# Affine that fuses: p -> p + 0.5 -> /div (x/W, y/H, z/D) -> 2*c - 1
#   c_k = p_k * (2/div_k) + (1/div_k - 1)
# NOTE: baked at import time from INPUT_IMAGE_SIZE (module constant).
_H, _W, _D = INPUT_IMAGE_SIZE
_DIV = (float(_W), float(_H), float(_D))                 # x/W, y/H, z/D order
_SCALE = tuple(2.0 / d for d in _DIV)
_OFFSET = tuple(1.0 / d - 1.0 for d in _DIV)


# ----------------------------- Pallas kernel ------------------------------ #
def _prompt_pe_kernel(rows_ref, table_ref, out_ref):
    E = out_ref.shape[1]

    rows = rows_ref[...]                                  # (Rpad, 128), read once
    tbl = table_ref[...]                                  # (16, 128), read once

    # Fused coordinate affine (constants baked in, applied per column).
    cx = rows[:, 0:1] * _SCALE[0] + _OFFSET[0]            # (R, 1)
    cy = rows[:, 1:2] * _SCALE[1] + _OFFSET[1]
    cz = rows[:, 2:3] * _SCALE[2] + _OFFSET[2]
    lab = rows[:, 3:4]                                    # (R, 1) label as f32

    # Packed parameter table:
    #   rows 0..2 : 2*pi*gauss, duplicated into lanes [0:F) and [F:E)
    #   row  3    : phase (0 in lanes [0:F), pi/2 in lanes [F:E))
    #   rows 4..8 : not_a_point, pt0, pt1, box0, box1 embeddings (E lanes)
    g0 = tbl[0:1, 0:E]
    g1 = tbl[1:2, 0:E]
    g2 = tbl[2:3, 0:E]
    phase = tbl[3:4, 0:E]

    # (R,3)@(3,E) as three broadcast MACs (K=3 -> keep off the MXU) + phase.
    proj = cx * g0 + cy * g1 + cz * g2 + phase            # (R, E)
    pe = jnp.sin(proj)                                    # lanes [0:F)=sin, [F:E)=cos

    e_na = tbl[4:5, 0:E]
    e0 = tbl[5:6, 0:E]
    e1 = tbl[6:7, 0:E]
    e2 = tbl[7:8, 0:E]
    e3 = tbl[8:9, 0:E]

    # Independent label masks (co-issuable MACs instead of a serial select chain).
    is_na = (lab == -1.0).astype(jnp.float32)
    m0 = (lab == 0.0).astype(jnp.float32)
    m1 = (lab == 1.0).astype(jnp.float32)
    m2 = (lab == 2.0).astype(jnp.float32)
    m3 = (lab == 3.0).astype(jnp.float32)
    is_text = (lab == TEXT_LABEL).astype(jnp.float32)
    pe_valid = m0 + m1 + m2 + m3                          # pe only for labels 0..3

    emb = is_na * e_na + m0 * e0 + m1 * e1 + m2 * e2 + m3 * e3
    text_vals = rows[:, TEXT_COL:TEXT_COL + E]            # (R, E) text payload

    # Single lane-dense (R, E) store.
    out_ref[...] = pe_valid * pe + emb + is_text * text_vals


def _encode_pallas(rows, table):
    Rpad = rows.shape[0]
    return pl.pallas_call(
        _prompt_pe_kernel,
        out_shape=jax.ShapeDtypeStruct((Rpad, EMBED_DIM), jnp.float32),
        in_specs=[
            pl.BlockSpec(memory_space=pltpu.MemorySpace.VMEM),
            pl.BlockSpec(memory_space=pltpu.MemorySpace.VMEM),
        ],
        out_specs=pl.BlockSpec(memory_space=pltpu.MemorySpace.VMEM),
    )(rows, table)


# ------------------------------- parameters -------------------------------- #
def pack_params(gauss, emb):
    """Pack gauss (3,F) and 5 embedding rows (5,E) into one (16,128) f32 table.

    Row layout:
      0..2 : 2*pi*gauss duplicated across lanes [0:F) and [F:E)   (sin & cos halves)
      3    : phase row (0 | pi/2)  -> cos(x) = sin(x + pi/2)
      4..8 : not_a_point, point_emb0, point_emb1, box_emb0, box_emb1
    Done once at parameter-construction time -> single small operand DMA per call.
    """
    gauss = jnp.asarray(gauss, jnp.float32)
    emb = jnp.asarray(emb, jnp.float32)
    F = gauss.shape[1]
    E = emb.shape[1]
    g2pi = (2.0 * np.pi) * gauss
    table = jnp.zeros((16, 128), jnp.float32)
    table = table.at[0:3, 0:F].set(g2pi)
    table = table.at[0:3, F:E].set(g2pi)
    table = table.at[3, F:E].set(np.pi / 2.0)
    table = table.at[4:9, 0:E].set(emb)
    return table


# ------------------------------- JAX glue ---------------------------------- #
def _pack_rows(coords, labels):
    """coords (B,N,3) f32 + labels (B,N) f32 -> (B,N,ROW_WIDTH) packed rows."""
    B, N, _ = coords.shape
    return jnp.concatenate(
        [coords, labels[..., None],
         jnp.zeros((B, N, ROW_WIDTH - 4), jnp.float32)], axis=-1)


def _pack_text_rows(text):
    """text (B,T,E) -> (B,T,ROW_WIDTH) rows with label=TEXT_LABEL and payload at TEXT_COL."""
    text = text.astype(jnp.float32)
    B, T, E = text.shape
    return jnp.concatenate(
        [jnp.zeros((B, T, 3), jnp.float32),
         jnp.full((B, T, 1), TEXT_LABEL, jnp.float32),
         jnp.zeros((B, T, TEXT_COL - 4), jnp.float32),
         text,
         jnp.zeros((B, T, ROW_WIDTH - TEXT_COL - E), jnp.float32)], axis=-1)


def prompt_encoder_forward(params, points=None, boxes=None, text_embedding=None):
    """Equivalent of nnPromptEncoder.forward -> sparse_embeddings (B, Ntot, embed_dim)."""
    table = params["table"]
    parts = []
    if points is not None:
        pts, labs = points
        pts = pts.astype(jnp.float32)
        labs = labs.astype(jnp.float32)
        if boxes is None:  # pad with a "not a point" like torch
            pts = jnp.concatenate(
                [pts, jnp.zeros((pts.shape[0], 1, 3), jnp.float32)], axis=1)
            labs = jnp.concatenate(
                [labs, -jnp.ones((labs.shape[0], 1), jnp.float32)], axis=1)
        parts.append(_pack_rows(pts, labs))
    if boxes is not None:
        corners = boxes.astype(jnp.float32).reshape(-1, 2, 3)
        blabs = jnp.broadcast_to(jnp.array([[2.0, 3.0]], jnp.float32),
                                 (corners.shape[0], 2))
        parts.append(_pack_rows(corners, blabs))
    if not parts:
        if text_embedding is not None:
            return text_embedding.astype(jnp.float32)
        return jnp.zeros((1, 0, EMBED_DIM), jnp.float32)
    if text_embedding is not None:
        parts.append(_pack_text_rows(text_embedding))

    rows3d = parts[0] if len(parts) == 1 else jnp.concatenate(parts, axis=1)
    B, Ntot, _ = rows3d.shape
    R = B * Ntot
    Rpad = max(8, ((R + 7) // 8) * 8)                     # sublane-aligned row count
    rows = rows3d.reshape(R, ROW_WIDTH)
    if Rpad != R:
        # pad rows carry label 0.0 -> garbage output rows that are sliced off below
        rows = jnp.pad(rows, ((0, Rpad - R), (0, 0)))
    out = _encode_pallas(rows, table)
    return out[:R].reshape(B, Ntot, EMBED_DIM)
    # TODO(synk): get_dense_pe() (dense cumsum-grid PE) is not part of forward(); omitted.
    # NOTE: labels outside {-1,0,1,2,3} yield a zero embedding instead of torch's OOB error.


# ---------------------------- pure-JAX reference --------------------------- #
def prompt_encoder_reference(gauss, emb, points=None, boxes=None, text_embedding=None):
    """Torch-faithful reference (sequential +0.5 / normalize / 2c-1 / einsum / cat)."""
    H, W, D = INPUT_IMAGE_SIZE
    div = jnp.array([W, H, D], jnp.float32)

    def pe_encoding(coords):
        c = 2.0 * coords - 1.0
        proj = 2.0 * np.pi * jnp.einsum("bnk,kf->bnf", c, gauss)
        return jnp.concatenate([jnp.sin(proj), jnp.cos(proj)], axis=-1)

    outputs = []
    if points is not None:
        pts, labs = points
        pts = pts.astype(jnp.float32) + 0.5
        labs = labs.astype(jnp.int32)
        if boxes is None:
            pts = jnp.concatenate(
                [pts, jnp.zeros((pts.shape[0], 1, 3), jnp.float32)], axis=1)
            labs = jnp.concatenate(
                [labs, -jnp.ones((labs.shape[0], 1), jnp.int32)], axis=1)
        pe = pe_encoding(pts / div)
        lab = labs[..., None]
        pe = jnp.where(lab == -1, 0.0, pe)
        pe = pe + jnp.where(lab == -1, emb[0][None, None, :], 0.0)
        pe = pe + jnp.where(lab == 0, emb[1][None, None, :], 0.0)
        pe = pe + jnp.where(lab == 1, emb[2][None, None, :], 0.0)
        outputs.append(pe)
    if boxes is not None:
        b = boxes.astype(jnp.float32) + 0.5
        corners = b.reshape(-1, 2, 3)
        pe = pe_encoding(corners / div)
        pe = pe.at[:, 0, :].add(emb[3])
        pe = pe.at[:, 1, :].add(emb[4])
        outputs.append(pe)
    if text_embedding is not None:
        outputs.append(text_embedding.astype(jnp.float32))
    return jnp.concatenate(outputs, axis=1)


# ---------------------------------- main ----------------------------------- #
if __name__ == "__main__":
    key = jax.random.PRNGKey(0)
    k_g, k_e, k_p, k_l, k_b, k_t = jax.random.split(key, 6)

    # Deterministic "parameters" (nn.Embedding / gaussian buffer ~ N(0,1)).
    gauss = jax.random.normal(k_g, (3, EMBED_DIM // 2), jnp.float32)
    emb = jax.random.normal(k_e, (5, EMBED_DIM), jnp.float32)
    params = {"table": pack_params(gauss, emb)}

    B, NP = 2, 8
    points_xyz = jax.random.uniform(k_p, (B, NP, 3), jnp.float32) * 16.0
    point_labels = jax.random.randint(k_l, (B, NP), -1, 2).astype(jnp.int32)  # {-1,0,1}
    boxes = jax.random.uniform(k_b, (B, 6), jnp.float32) * 16.0
    text_embedding = jax.random.normal(k_t, (B, 1, EMBED_DIM), jnp.float32)

    # points + boxes + text (text concat folded into the kernel)
    out = prompt_encoder_forward(
        params, points=(points_xyz, point_labels), boxes=boxes,
        text_embedding=text_embedding)
    out = jax.block_until_ready(out)
    ref = prompt_encoder_reference(
        gauss, emb, points=(points_xyz, point_labels), boxes=boxes,
        text_embedding=text_embedding)
    ref = jax.block_until_ready(ref)
    assert out.shape == (B, NP + 2 + 1, EMBED_DIM), out.shape
    np.testing.assert_allclose(np.asarray(out), np.asarray(ref), rtol=1e-4, atol=1e-4)

    # points-only path (pad=True adds a -1 "not a point").
    out_pts = jax.block_until_ready(
        prompt_encoder_forward(params, points=(points_xyz, point_labels)))
    ref_pts = jax.block_until_ready(
        prompt_encoder_reference(gauss, emb, points=(points_xyz, point_labels)))
    assert out_pts.shape == (B, NP + 1, EMBED_DIM), out_pts.shape
    np.testing.assert_allclose(np.asarray(out_pts), np.asarray(ref_pts),
                               rtol=1e-4, atol=1e-4)

    # boxes-only path.
    out_box = jax.block_until_ready(prompt_encoder_forward(params, boxes=boxes))
    ref_box = jax.block_until_ready(prompt_encoder_reference(gauss, emb, boxes=boxes))
    assert out_box.shape == (B, 2, EMBED_DIM), out_box.shape
    np.testing.assert_allclose(np.asarray(out_box), np.asarray(ref_box),
                               rtol=1e-4, atol=1e-4)

    # text-only path (no kernel needed).
    out_txt = jax.block_until_ready(
        prompt_encoder_forward(params, text_embedding=text_embedding))
    np.testing.assert_allclose(np.asarray(out_txt), np.asarray(text_embedding),
                               rtol=1e-6, atol=1e-6)

    print("KERNEL_OK")
</pallas_src>

<mosaic_0001>
module attributes {stable_mosaic.version = 11 : i64} {
  func.func @_prompt_pe_kernel(%arg0: memref<24x128xf32, #tpu.memory_space<vmem>>, %arg1: memref<16x128xf32, #tpu.memory_space<vmem>>, %arg2: memref<24x32xf32, #tpu.memory_space<vmem>>) attributes {dimension_semantics = [], scalar_prefetch = 0 : i64, scratch_operands = 0 : i64, tpu.core_type = #tpu.core_type<tc>} {
    %c0 = arith.constant 0 : index
    %c0_0 = arith.constant 0 : index
    %0 = vector.load %arg0[%c0, %c0_0] : memref<24x128xf32, #tpu.memory_space<vmem>>, vector<24x128xf32>
    %c0_1 = arith.constant 0 : index
    %c0_2 = arith.constant 0 : index
    %1 = vector.load %arg1[%c0_1, %c0_2] : memref<16x128xf32, #tpu.memory_space<vmem>>, vector<16x128xf32>
    %2 = vector.extract_strided_slice %0 {offsets = [0, 0], sizes = [24, 1], strides = [1, 1]} : vector<24x128xf32> to vector<24x1xf32>
    %cst = arith.constant 1.250000e-01 : f32
    %3 = vector.broadcast %cst : f32 to vector<24x1xf32>
    %4 = arith.mulf %2, %3 : vector<24x1xf32>
    %cst_3 = arith.constant -9.375000e-01 : f32
    %5 = vector.broadcast %cst_3 : f32 to vector<24x1xf32>
    %6 = arith.addf %4, %5 : vector<24x1xf32>
    %7 = vector.extract_strided_slice %0 {offsets = [0, 1], sizes = [24, 1], strides = [1, 1]} : vector<24x128xf32> to vector<24x1xf32>
    %cst_4 = arith.constant 1.250000e-01 : f32
    %8 = vector.broadcast %cst_4 : f32 to vector<24x1xf32>
    %9 = arith.mulf %7, %8 : vector<24x1xf32>
    %cst_5 = arith.constant -9.375000e-01 : f32
    %10 = vector.broadcast %cst_5 : f32 to vector<24x1xf32>
    %11 = arith.addf %9, %10 : vector<24x1xf32>
    %12 = vector.extract_strided_slice %0 {offsets = [0, 2], sizes = [24, 1], strides = [1, 1]} : vector<24x128xf32> to vector<24x1xf32>
    %cst_6 = arith.constant 1.250000e-01 : f32
    %13 = vector.broadcast %cst_6 : f32 to vector<24x1xf32>
    %14 = arith.mulf %12, %13 : vector<24x1xf32>
    %cst_7 = arith.constant -9.375000e-01 : f32
    %15 = vector.broadcast %cst_7 : f32 to vector<24x1xf32>
    %16 = arith.addf %14, %15 : vector<24x1xf32>
    %17 = vector.extract_strided_slice %0 {offsets = [0, 3], sizes = [24, 1], strides = [1, 1]} : vector<24x128xf32> to vector<24x1xf32>
    %18 = vector.extract_strided_slice %1 {offsets = [0, 0], sizes = [1, 32], strides = [1, 1]} : vector<16x128xf32> to vector<1x32xf32>
    %19 = vector.extract_strided_slice %1 {offsets = [1, 0], sizes = [1, 32], strides = [1, 1]} : vector<16x128xf32> to vector<1x32xf32>
    %20 = vector.extract_strided_slice %1 {offsets = [2, 0], sizes = [1, 32], strides = [1, 1]} : vector<16x128xf32> to vector<1x32xf32>
    %21 = vector.extract_strided_slice %1 {offsets = [3, 0], sizes = [1, 32], strides = [1, 1]} : vector<16x128xf32> to vector<1x32xf32>
    %22 = vector.broadcast %6 : vector<24x1xf32> to vector<24x32xf32>
    %23 = vector.broadcast %18 : vector<1x32xf32> to vector<24x32xf32>
    %24 = arith.mulf %22, %23 : vector<24x32xf32>
    %25 = vector.broadcast %11 : vector<24x1xf32> to vector<24x32xf32>
    %26 = vector.broadcast %19 : vector<1x32xf32> to vector<24x32xf32>
    %27 = arith.mulf %25, %26 : vector<24x32xf32>
    %28 = arith.addf %24, %27 : vector<24x32xf32>
    %29 = vector.broadcast %16 : vector<24x1xf32> to vector<24x32xf32>
    %30 = vector.broadcast %20 : vector<1x32xf32> to vector<24x32xf32>
    %31 = arith.mulf %29, %30 : vector<24x32xf32>
    %32 = arith.addf %28, %31 : vector<24x32xf32>
    %33 = vector.broadcast %21 : vector<1x32xf32> to vector<24x32xf32>
    %34 = arith.addf %32, %33 : vector<24x32xf32>
    %35 = math.sin %34 : vector<24x32xf32>
    %36 = vector.extract_strided_slice %1 {offsets = [4, 0], sizes = [1, 32], strides = [1, 1]} : vector<16x128xf32> to vector<1x32xf32>
    %37 = vector.extract_strided_slice %1 {offsets = [5, 0], sizes = [1, 32], strides = [1, 1]} : vector<16x128xf32> to vector<1x32xf32>
    %38 = vector.extract_strided_slice %1 {offsets = [6, 0], sizes = [1, 32], strides = [1, 1]} : vector<16x128xf32> to vector<1x32xf32>
    %39 = vector.extract_strided_slice %1 {offsets = [7, 0], sizes = [1, 32], strides = [1, 1]} : vector<16x128xf32> to vector<1x32xf32>
    %40 = vector.extract_strided_slice %1 {offsets = [8, 0], sizes = [1, 32], strides = [1, 1]} : vector<16x128xf32> to vector<1x32xf32>
    %cst_8 = arith.constant -1.000000e+00 : f32
    %41 = vector.broadcast %cst_8 : f32 to vector<24x1xf32>
    %42 = arith.cmpf oeq, %17, %41 : vector<24x1xf32>
    %43 = arith.extui %42 : vector<24x1xi1> to vector<24x1xi32>
    %44 = arith.sitofp %43 : vector<24x1xi32> to vector<24x1xf32>
    %cst_9 = arith.constant 0.000000e+00 : f32
    %45 = vector.broadcast %cst_9 : f32 to vector<24x1xf32>
    %46 = arith.cmpf oeq, %17, %45 : vector<24x1xf32>
    %47 = arith.extui %46 : vector<24x1xi1> to vector<24x1xi32>
    %48 = arith.sitofp %47 : vector<24x1xi32> to vector<24x1xf32>
    %cst_10 = arith.constant 1.000000e+00 : f32
    %49 = vector.broadcast %cst_10 : f32 to vector<24x1xf32>
    %50 = arith.cmpf oeq, %17, %49 : vector<24x1xf32>
    %51 = arith.extui %50 : vector<24x1xi1> to vector<24x1xi32>
    %52 = arith.sitofp %51 : vector<24x1xi32> to vector<24x1xf32>
    %cst_11 = arith.constant 2.000000e+00 : f32
    %53 = vector.broadcast %cst_11 : f32 to vector<24x1xf32>
    %54 = arith.cmpf oeq, %17, %53 : vector<24x1xf32>
    %55 = arith.extui %54 : vector<24x1xi1> to vector<24x1xi32>
    %56 = arith.sitofp %55 : vector<24x1xi32> to vector<24x1xf32>
    %cst_12 = arith.constant 3.000000e+00 : f32
    %57 = vector.broadcast %cst_12 : f32 to vector<24x1xf32>
    %58 = arith.cmpf oeq, %17, %57 : vector<24x1xf32>
    %59 = arith.extui %58 : vector<24x1xi1> to vector<24x1xi32>
    %60 = arith.sitofp %59 : vector<24x1xi32> to vector<24x1xf32>
    %cst_13 = arith.constant 4.000000e+00 : f32
    %61 = vector.broadcast %cst_13 : f32 to vector<24x1xf32>
    %62 = arith.cmpf oeq, %17, %61 : vector<24x1xf32>
    %63 = arith.extui %62 : vector<24x1xi1> to vector<24x1xi32>
    %64 = arith.sitofp %63 : vector<24x1xi32> to vector<24x1xf32>
    %65 = arith.addf %48, %52 : vector<24x1xf32>
    %66 = arith.addf %65, %56 : vector<24x1xf32>
    %67 = arith.addf %66, %60 : vector<24x1xf32>
    %68 = vector.broadcast %44 : vector<24x1xf32> to vector<24x32xf32>
    %69 = vector.broadcast %36 : vector<1x32xf32> to vector<24x32xf32>
    %70 = arith.mulf %68, %69 : vector<24x32xf32>
    %71 = vector.broadcast %48 : vector<24x1xf32> to vector<24x32xf32>
    %72 = vector.broadcast %37 : vector<1x32xf32> to vector<24x32xf32>
    %73 = arith.mulf %71, %72 : vector<24x32xf32>
    %74 = arith.addf %70, %73 : vector<24x32xf32>
    %75 = vector.broadcast %52 : vector<24x1xf32> to vector<24x32xf32>
    %76 = vector.broadcast %38 : vector<1x32xf32> to vector<24x32xf32>
    %77 = arith.mulf %75, %76 : vector<24x32xf32>
    %78 = arith.addf %74, %77 : vector<24x32xf32>
    %79 = vector.broadcast %56 : vector<24x1xf32> to vector<24x32xf32>
    %80 = vector.broadcast %39 : vector<1x32xf32> to vector<24x32xf32>
    %81 = arith.mulf %79, %80 : vector<24x32xf32>
    %82 = arith.addf %78, %81 : vector<24x32xf32>
    %83 = vector.broadcast %60 : vector<24x1xf32> to vector<24x32xf32>
    %84 = vector.broadcast %40 : vector<1x32xf32> to vector<24x32xf32>
    %85 = arith.mulf %83, %84 : vector<24x32xf32>
    %86 = arith.addf %82, %85 : vector<24x32xf32>
    %87 = vector.extract_strided_slice %0 {offsets = [0, 64], sizes = [24, 32], strides = [1, 1]} : vector<24x128xf32> to vector<24x32xf32>
    %88 = vector.broadcast %67 : vector<24x1xf32> to vector<24x32xf32>
    %89 = arith.mulf %88, %35 : vector<24x32xf32>
    %90 = arith.addf %89, %86 : vector<24x32xf32>
    %91 = vector.broadcast %64 : vector<24x1xf32> to vector<24x32xf32>
    %92 = arith.mulf %91, %87 : vector<24x32xf32>
    %93 = arith.addf %90, %92 : vector<24x32xf32>
    %c0_14 = arith.constant 0 : index
    %c0_15 = arith.constant 0 : index
    %94 = vector.load %arg2[%c0_14, %c0_15] : memref<24x32xf32, #tpu.memory_space<vmem>>, vector<24x32xf32>
    tpu.vector_store %arg2[%c0_14, %c0_15], %93 {strides = array<i32>} : memref<24x32xf32, #tpu.memory_space<vmem>>, vector<24x32xf32>,
    return
  }
}

</mosaic_0001>

<llo_original>
// kernel: tpu_custom_call.1
$region0: #{tpu_custom_call.1}
  #allocation0 [shape = 'u32[]', space=smem, size = 0x4, offset = 0x4, fixed_abs, tag = 'smem constant byte address 0x4 - core index']
  #allocation1 [shape = 'u32[144,128]{1,0:T(1,128)}', space=vmem, size = 0x12000, scoped, tag = 'internal scratch']
  %s0 = inlined_call_operand.hbm [shape: f32[24,128], index: 0, kind: input, shape index: {}]
  %s1 = inlined_call_operand.hbm [shape: f32[16,128], index: 1, kind: input, shape index: {}]
  %s2 = inlined_call_operand.hbm [shape: f32[24,32], index: 2, kind: output, shape index: {}]
  %s3 = sld [smem:[#allocation0]]
  $region26: #{tpu_custom_call.1} parent=0
    _
  %s5 = ssub.s32 1, %s3
  %s6 = scalar_select 0, %s5, %s3
  $region1: #{tpu_custom_call.1} parent=0
    #allocation2 [shape = 'u8[12288]{0}', space=vmem, size = 0x3000, scoped, tag = 'input window, operand 0, single buffered']
    #allocation3 [shape = 's32[1]{0}', space=sflag, size = 0x4, scoped, tag = 'scoped memory for tpu_custom_call.1']
    #allocation4 [shape = 's32[1]{0}', space=sflag, size = 0x4, scoped, tag = 'scoped memory for tpu_custom_call.1']
    #allocation5 [shape = 'u8[8192]{0}', space=vmem, size = 0x2000, scoped, tag = 'input window, operand 1, single buffered']
    #allocation6 [shape = 's32[1]{0}', space=sflag, size = 0x4, scoped, tag = 'scoped memory for tpu_custom_call.1']
    #allocation7 [shape = 'u8[12288]{0}', space=vmem, size = 0x3000, scoped, tag = 'output window, operand 0, single buffered']
    %7 = vsyncpa [#allocation3], 0
    %8 = vsyncpa [#allocation6], 0
    %9 = vsyncpa [#allocation4], 0
    // Predicated region
    $region2: #{tpu_custom_call.1} parent=1 // pred_check
      _
    $region3: #{tpu_custom_call.1} parent=1 // pred_check_branch
      %11 = sbr.rel (0) target = $region5
    $region4: #{tpu_custom_call.1} parent=1 // pred_region
      %s13 = ssub.s32 384, 384
      %14 = vsyncadd [#allocation3], %s13
      %s15 = sshll.u32 [#allocation2], 4
      %s16 = int_to_ptr.vmem [resolvable:$true] %s15
      %21 = dma.hbm_to_vmem [thread:$0]  %s0, 384, %s16, [#allocation3], 128, 128, 8
    $region5: #{tpu_custom_call.1} parent=1 // pred_fallthru
      _
    // Predicated region
    $region6: #{tpu_custom_call.1} parent=1 // pred_check
      _
    $region7: #{tpu_custom_call.1} parent=1 // pred_check_branch
      %23 = sbr.rel (0) target = $region9
    $region8: #{tpu_custom_call.1} parent=1 // pred_region
      %s25 = ssub.s32 256, 256
      %26 = vsyncadd [#allocation6], %s25
      %s27 = sshll.u32 [#allocation5], 4
      %s28 = int_to_ptr.vmem [resolvable:$true] %s27
      %33 = dma.hbm_to_vmem [thread:$0]  %s1, 256, %s28, [#allocation6], 128, 128, 8
    $region9: #{tpu_custom_call.1} parent=1 // pred_fallthru
      _
    // Predicated region
    $region10: #{tpu_custom_call.1} parent=1 // pred_check
      _
    $region11: #{tpu_custom_call.1} parent=1 // pred_check_branch
      %35 = sbr.rel (0) target = $region13
    $region12: #{tpu_custom_call.1} parent=1 // pred_region
      %36 = dma.done [#allocation3], 384
    $region13: #{tpu_custom_call.1} parent=1 // pred_fallthru
      _
    // Predicated region
    $region14: #{tpu_custom_call.1} parent=1 // pred_check
      _
    $region15: #{tpu_custom_call.1} parent=1 // pred_check_branch
      %38 = sbr.rel (0) target = $region17
    $region16: #{tpu_custom_call.1} parent=1 // pred_region
      %39 = dma.done [#allocation6], 256
    $region17: #{tpu_custom_call.1} parent=1 // pred_fallthru
      _
    %v40 = vld [vmem:[#allocation2] sm:$0xff]
    %v41 = vld [vmem:[#allocation2 + $0x8] sm:$0xff]
    %v42 = vld [vmem:[#allocation2 + $0x10] sm:$0xff]
    %v43 = vld [vmem:[#allocation5] sm:$0xff]
    %v44 = vld [vmem:[#allocation5 + $0x8] sm:$0xff]
    %v45 = vmul.f32 %v40, 0.125
    %v46 = vmul.f32 %v41, 0.125
    %v47 = vmul.f32 %v42, 0.125
    %v48 = vadd.f32 %v45, -0.9375
    %v49 = vadd.f32 %v46, -0.9375
    %v50 = vadd.f32 %v47, -0.9375
    %52 = vset.pattern.permute.xlu0 0
    %53 = vperm.xlu0 %52, %v48
    %v54 = vpop.permute.xlu0 %53
    %57 = vset.pattern.permute.xlu0 0
    %58 = vperm.xlu0 %57, %v49
    %v59 = vpop.permute.xlu0 %58
    %62 = vset.pattern.permute.xlu0 0
    %63 = vperm.xlu0 %62, %v50
    %v64 = vpop.permute.xlu0 %63
    %v66 = vlaneseq
    %v67 = vshrl.u32 %v66, 7
    %v68 = vsub.s32 0, %v67
    %v69 = vrot.slane %v43, %v68
    %v70 = vmul.f32 %v54, %v69
    %v71 = vmul.f32 %v59, %v69
    %v72 = vmul.f32 %v64, %v69
    %73 = vset.pattern.permute.xlu0 1
    %74 = vperm.xlu0 %73, %v48
    %v75 = vpop.permute.xlu0 %74
    %77 = vset.pattern.permute.xlu0 1
    %78 = vperm.xlu0 %77, %v49
    %v79 = vpop.permute.xlu0 %78
    %81 = vset.pattern.permute.xlu0 1
    %82 = vperm.xlu0 %81, %v50
    %v83 = vpop.permute.xlu0 %82
    %v85 = vlaneseq
    %v86 = vshrl.u32 %v85, 7
    %v87 = vsub.s32 1, %v86
    %v88 = vrot.slane %v43, %v87
    %v89 = vmul.f32 %v75, %v88
    %v90 = vmul.f32 %v79, %v88
    %v91 = vmul.f32 %v83, %v88
    %v92 = vadd.f32 %v70, %v89
    %v93 = vadd.f32 %v71, %v90
    %v94 = vadd.f32 %v72, %v91
    %95 = vset.pattern.permute.xlu0 2
    %96 = vperm.xlu0 %95, %v48
    %v97 = vpop.permute.xlu0 %96
    %99 = vset.pattern.permute.xlu0 2
    %100 = vperm.xlu0 %99, %v49
    %v101 = vpop.permute.xlu0 %100
    %103 = vset.pattern.permute.xlu0 2
    %104 = vperm.xlu0 %103, %v50
    %v105 = vpop.permute.xlu0 %104
    %v107 = vlaneseq
    %v108 = vshrl.u32 %v107, 7
    %v109 = vsub.s32 2, %v108
    %v110 = vrot.slane %v43, %v109
    %v111 = vmul.f32 %v97, %v110
    %v112 = vmul.f32 %v101, %v110
    %v113 = vmul.f32 %v105, %v110
    %v114 = vadd.f32 %v92, %v111
    %v115 = vadd.f32 %v93, %v112
    %v116 = vadd.f32 %v94, %v113
    %v117 = vlaneseq
    %v118 = vshrl.u32 %v117, 7
    %v119 = vsub.s32 3, %v118
    %v120 = vrot.slane %v43, %v119
    %v121 = vadd.f32 %v114, %v120
    %v122 = vadd.f32 %v115, %v120
    %v123 = vadd.f32 %v116, %v120
    %v124 = vand.u32 2147483647, %v121
    %vm125 = vcmp.le.f32.partialorder %v124, 0.7853982
    %vm126 = vcmp.lt.s32.totalorder %v121, 0
    %v127 = vand.u32 %v121, 2139095040
    %v128 = vshrl.u32 %v127, 23
    %v129 = vsub.s32 %v128, 127
    %v130 = vand.u32 2147483647, %v121
    %v131 = vand.u32 %v130, 8388607
    %v132 = vor.u32 %v131, 8388608
    %v133 = vsub.s32 0, %v132
    %v134 = vadd.s32 %v129, 1
    %vm135 = vcmp.gt.s32.totalorder %v134, 0
    %v136 = vsel %vm135, %v134, 0
    %v137 = vshrl.u32 %v136, 5
    %v138 = vand.u32 %v136, 31
    %v139 = vsub.s32 32, %v138
    %v140 = vshrl.u32 683565275, %v139
    %v141 = vshll.u32 683565275, %v138
    %v142 = vshrl.u32 2475754826, %v139
    %v143 = vor.u32 %v141, %v142
    %v144 = vshll.u32 2475754826, %v138
    %v145 = vshrl.u32 2131351028, %v139
    %v146 = vor.u32 %v144, %v145
    %v147 = vshll.u32 2131351028, %v138
    %v148 = vshrl.u32 2102212464, %v139
    %v149 = vor.u32 %v147, %v148
    %v150 = vshll.u32 2102212464, %v138
    %v151 = vshrl.u32 920167782, %v139
    %v152 = vor.u32 %v150, %v151
    %v153 = vshll.u32 920167782, %v138
    %v154 = vshrl.u32 1326507024, %v139
    %v155 = vor.u32 %v153, %v154
    %vm156 = vcmp.lt.s32.totalorder %v137, 1
    %vm157 = vcmp.lt.s32.totalorder %v137, 2
    %vm158 = vcmp.lt.s32.totalorder %v137, 3
    %vm159 = vcmp.lt.s32.totalorder %v137, 4
    %v160 = vsel %vm156, %v140, %v143
    %v161 = vsel %vm159, %v149, 2102212464
    %v162 = vsel %vm158, %v146, %v161
    %v163 = vsel %vm157, %v160, %v162
    %v164 = vsel %vm156, %v143, %v146
    %v165 = vsel %vm159, %v152, 920167782
    %v166 = vsel %vm158, %v149, %v165
    %v167 = vsel %vm157, %v164, %v166
    %v168 = vsel %vm156, %v146, %v149
    %v169 = vsel %vm159, %v155, 1326507024
    %v170 = vsel %vm158, %v152, %v169
    %v171 = vsel %vm157, %v168, %v170
    %v172 = vshll.u32 %v132, 8
    %v173 = vmul.u32.u64.compose %v172, %v171
    %v174 = vextract.low.u32 %v173
    %v175 = vextract.high.u32 %v173
    %v176 = vmul.u32.u64.compose %v172, %v167
    %v177 = vextract.low.u32 %v176
    %v178 = vextract.high.u32 %v176
    %v179 = vmul.u32 %v172, %v163
    %v180 = vadd.s32 %v175, %v177
    %vm181 = vc.u32 %v175, %v177
    %v182 = vadd.s32 %v178, 1
    %v183 = vsel %vm181, %v182, %v178
    %v184 = vadd.s32 %v179, %v183
    %v185 = vadd.s32 %v184, 536870912
    %v186 = vshrl.u32 %v185, 30
    %v187 = vshll.u32 %v186, 30
    %v188 = vsub.s32 %v184, %v187
    %vm189 = vcmp.lt.s32.totalorder %v188, 0
    %v190 = vsub.s32 0, %v188
    %v191 = vsel %vm189, %v190, %v188
    %v192 = vclz %v191
    %v193 = vsub.s32 %v192, 2
    %vm194 = vcmp.gt.s32.totalorder 0, %v193
    %v195 = vsel %vm194, 0, %v193
    %v196 = vsub.s32 32, %v195
    %v197 = vshll.u32 %v188, %v195
    %v198 = vshrl.u32 %v180, %v196
    %v199 = vor.u32 %v197, %v198
    %v200 = vsub.s32 4294967266, %v195
    %v201 = vadd.s32 %v200, 127
    %v202 = vshll.u32 %v201, 23
    %v203 = vor.u32 4788187, %v202
    %v204 = vand.u32 2147483647, %v203
    %v206 = vcvt.s32.f32 %v199
    %v207 = vmul.f32 %v206, %v204
    %v208 = vxor.u32 %v207, 2147483648
    %v209 = vsel %vm126, %v208, %v207
    %v210 = vsub.s32 4, %v186
    %v211 = vsel %vm126, %v210, %v186
    %v212 = vsel %vm125, %v121, %v209
    %v213 = vsel %vm125, 0, %v211
    %v214 = vcosq.f32.pop %v212
    %v215 = vsinq.f32.pop %v212
    %vm216 = vweird.f32 %v121
    %v217 = vadd.s32 %v213, 3
    %v218 = vand.u32 %v217, 3
    %vm219 = vcmp.lt.s32.totalorder %v218, 2
    %vm220 = vcmp.eq.s32.totalorder %v218, 0
    %v221 = vxor.u32 %v215, 2147483648
    %v222 = vsel %vm220, %v214, %v221
    %vm223 = vcmp.eq.s32.totalorder %v218, 2
    %v224 = vxor.u32 %v214, 2147483648
    %v225 = vsel %vm223, %v224, %v215
    %v226 = vsel %vm219, %v222, %v225
    %v227 = vsel %vm216, nan, %v226
    %v228 = vand.u32 2147483647, %v122
    %vm229 = vcmp.le.f32.partialorder %v228, 0.7853982
    %vm230 = vcmp.lt.s32.totalorder %v122, 0
    %v231 = vand.u32 %v122, 2139095040
    %v232 = vshrl.u32 %v231, 23
    %v233 = vsub.s32 %v232, 127
    %v234 = vand.u32 2147483647, %v122
    %v235 = vand.u32 %v234, 8388607
    %v236 = vor.u32 %v235, 8388608
    %v237 = vsub.s32 0, %v236
    %v238 = vadd.s32 %v233, 1
    %vm239 = vcmp.gt.s32.totalorder %v238, 0
    %v240 = vsel %vm239, %v238, 0
    %v241 = vshrl.u32 %v240, 5
    %v242 = vand.u32 %v240, 31
    %v243 = vsub.s32 32, %v242
    %v244 = vshrl.u32 683565275, %v243
    %v245 = vshll.u32 683565275, %v242
    %v246 = vshrl.u32 2475754826, %v243
    %v247 = vor.u32 %v245, %v246
    %v248 = vshll.u32 2475754826, %v242
    %v249 = vshrl.u32 2131351028, %v243
    %v250 = vor.u32 %v248, %v249
    %v251 = vshll.u32 2131351028, %v242
    %v252 = vshrl.u32 2102212464, %v243
    %v253 = vor.u32 %v251, %v252
    %v254 = vshll.u32 2102212464, %v242
    %v255 = vshrl.u32 920167782, %v243
    %v256 = vor.u32 %v254, %v255
    %v257 = vshll.u32 920167782, %v242
    %v258 = vshrl.u32 1326507024, %v243
    %v259 = vor.u32 %v257, %v258
    %vm260 = vcmp.lt.s32.totalorder %v241, 1
    %vm261 = vcmp.lt.s32.totalorder %v241, 2
    %vm262 = vcmp.lt.s32.totalorder %v241, 3
    %vm263 = vcmp.lt.s32.totalorder %v241, 4
    %v264 = vsel %vm260, %v244, %v247
    %v265 = vsel %vm263, %v253, 2102212464
    %v266 = vsel %vm262, %v250, %v265
    %v267 = vsel %vm261, %v264, %v266
    %v268 = vsel %vm260, %v247, %v250
    %v269 = vsel %vm263, %v256, 920167782
    %v270 = vsel %vm262, %v253, %v269
    %v271 = vsel %vm261, %v268, %v270
    %v272 = vsel %vm260, %v250, %v253
    %v273 = vsel %vm263, %v259, 1326507024
    %v274 = vsel %vm262, %v256, %v273
    %v275 = vsel %vm261, %v272, %v274
    %v276 = vshll.u32 %v236, 8
    %v277 = vmul.u32.u64.compose %v276, %v275
    %v278 = vextract.low.u32 %v277
    %v279 = vextract.high.u32 %v277
    %v280 = vmul.u32.u64.compose %v276, %v271
    %v281 = vextract.low.u32 %v280
    %v282 = vextract.high.u32 %v280
    %v283 = vmul.u32 %v276, %v267
    %v284 = vadd.s32 %v279, %v281
    %vm285 = vc.u32 %v279, %v281
    %v286 = vadd.s32 %v282, 1
    %v287 = vsel %vm285, %v286, %v282
    %v288 = vadd.s32 %v283, %v287
    %v289 = vadd.s32 %v288, 536870912
    %v290 = vshrl.u32 %v289, 30
    %v291 = vshll.u32 %v290, 30
    %v292 = vsub.s32 %v288, %v291
    %vm293 = vcmp.lt.s32.totalorder %v292, 0
    %v294 = vsub.s32 0, %v292
    %v295 = vsel %vm293, %v294, %v292
    %v296 = vclz %v295
    %v297 = vsub.s32 %v296, 2
    %vm298 = vcmp.gt.s32.totalorder 0, %v297
    %v299 = vsel %vm298, 0, %v297
    %v300 = vsub.s32 32, %v299
    %v301 = vshll.u32 %v292, %v299
    %v302 = vshrl.u32 %v284, %v300
    %v303 = vor.u32 %v301, %v302
    %v304 = vsub.s32 4294967266, %v299
    %v305 = vadd.s32 %v304, 127
    %v306 = vshll.u32 %v305, 23
    %v307 = vor.u32 4788187, %v306
    %v308 = vand.u32 2147483647, %v307
    %v310 = vcvt.s32.f32 %v303
    %v311 = vmul.f32 %v310, %v308
    %v312 = vxor.u32 %v311, 2147483648
    %v313 = vsel %vm230, %v312, %v311
    %v314 = vsub.s32 4, %v290
    %v315 = vsel %vm230, %v314, %v290
    %v316 = vsel %vm229, %v122, %v313
    %v317 = vsel %vm229, 0, %v315
    %v318 = vcosq.f32.pop %v316
    %v319 = vsinq.f32.pop %v316
    %vm320 = vweird.f32 %v122
    %v321 = vadd.s32 %v317, 3
    %v322 = vand.u32 %v321, 3
    %vm323 = vcmp.lt.s32.totalorder %v322, 2
    %vm324 = vcmp.eq.s32.totalorder %v322, 0
    %v325 = vxor.u32 %v319, 2147483648
    %v326 = vsel %vm324, %v318, %v325
    %vm327 = vcmp.eq.s32.totalorder %v322, 2
    %v328 = vxor.u32 %v318, 2147483648
    %v329 = vsel %vm327, %v328, %v319
    %v330 = vsel %vm323, %v326, %v329
    %v331 = vsel %vm320, nan, %v330
    %v332 = vand.u32 2147483647, %v123
    %vm333 = vcmp.le.f32.partialorder %v332, 0.7853982
    %vm334 = vcmp.lt.s32.totalorder %v123, 0
    %v335 = vand.u32 %v123, 2139095040
    %v336 = vshrl.u32 %v335, 23
    %v337 = vsub.s32 %v336, 127
    %v338 = vand.u32 2147483647, %v123
    %v339 = vand.u32 %v338, 8388607
    %v340 = vor.u32 %v339, 8388608
    %v341 = vsub.s32 0, %v340
    %v342 = vadd.s32 %v337, 1
    %vm343 = vcmp.gt.s32.totalorder %v342, 0
    %v344 = vsel %vm343, %v342, 0
    %v345 = vshrl.u32 %v344, 5
    %v346 = vand.u32 %v344, 31
    %v347 = vsub.s32 32, %v346
    %v348 = vshrl.u32 683565275, %v347
    %v349 = vshll.u32 683565275, %v346
    %v350 = vshrl.u32 2475754826, %v347
    %v351 = vor.u32 %v349, %v350
    %v352 = vshll.u32 2475754826, %v346
    %v353 = vshrl.u32 2131351028, %v347
    %v354 = vor.u32 %v352, %v353
    %v355 = vshll.u32 2131351028, %v346
    %v356 = vshrl.u32 2102212464, %v347
    %v357 = vor.u32 %v355, %v356
    %v358 = vshll.u32 2102212464, %v346
    %v359 = vshrl.u32 920167782, %v347
    %v360 = vor.u32 %v358, %v359
    %v361 = vshll.u32 920167782, %v346
    %v362 = vshrl.u32 1326507024, %v347
    %v363 = vor.u32 %v361, %v362
    %vm364 = vcmp.lt.s32.totalorder %v345, 1
    %vm365 = vcmp.lt.s32.totalorder %v345, 2
    %vm366 = vcmp.lt.s32.totalorder %v345, 3
    %vm367 = vcmp.lt.s32.totalorder %v345, 4
    %v368 = vsel %vm364, %v348, %v351
    %v369 = vsel %vm367, %v357, 2102212464
    %v370 = vsel %vm366, %v354, %v369
    %v371 = vsel %vm365, %v368, %v370
    %v372 = vsel %vm364, %v351, %v354
    %v373 = vsel %vm367, %v360, 920167782
    %v374 = vsel %vm366, %v357, %v373
    %v375 = vsel %vm365, %v372, %v374
    %v376 = vsel %vm364, %v354, %v357
    %v377 = vsel %vm367, %v363, 1326507024
    %v378 = vsel %vm366, %v360, %v377
    %v379 = vsel %vm365, %v376, %v378
    %v380 = vshll.u32 %v340, 8
    %v381 = vmul.u32.u64.compose %v380, %v379
    %v382 = vextract.low.u32 %v381
    %v383 = vextract.high.u32 %v381
    %v384 = vmul.u32.u64.compose %v380, %v375
    %v385 = vextract.low.u32 %v384
    %v386 = vextract.high.u32 %v384
    %v387 = vmul.u32 %v380, %v371
    %v388 = vadd.s32 %v383, %v385
    %vm389 = vc.u32 %v383, %v385
    %v390 = vadd.s32 %v386, 1
    %v391 = vsel %vm389, %v390, %v386
    %v392 = vadd.s32 %v387, %v391
    %v393 = vadd.s32 %v392, 536870912
    %v394 = vshrl.u32 %v393, 30
    %v395 = vshll.u32 %v394, 30
    %v396 = vsub.s32 %v392, %v395
    %vm397 = vcmp.lt.s32.totalorder %v396, 0
    %v398 = vsub.s32 0, %v396
    %v399 = vsel %vm397, %v398, %v396
    %v400 = vclz %v399
    %v401 = vsub.s32 %v400, 2
    %vm402 = vcmp.gt.s32.totalorder 0, %v401
    %v403 = vsel %vm402, 0, %v401
    %v404 = vsub.s32 32, %v403
    %v405 = vshll.u32 %v396, %v403
    %v406 = vshrl.u32 %v388, %v404
    %v407 = vor.u32 %v405, %v406
    %v408 = vsub.s32 4294967266, %v403
    %v409 = vadd.s32 %v408, 127
    %v410 = vshll.u32 %v409, 23
    %v411 = vor.u32 4788187, %v410
    %v412 = vand.u32 2147483647, %v411
    %v414 = vcvt.s32.f32 %v407
    %v415 = vmul.f32 %v414, %v412
    %v416 = vxor.u32 %v415, 2147483648
    %v417 = vsel %vm334, %v416, %v415
    %v418 = vsub.s32 4, %v394
    %v419 = vsel %vm334, %v418, %v394
    %v420 = vsel %vm333, %v123, %v417
    %v421 = vsel %vm333, 0, %v419
    %v422 = vcosq.f32.pop %v420
    %v423 = vsinq.f32.pop %v420
    %vm424 = vweird.f32 %v123
    %v425 = vadd.s32 %v421, 3
    %v426 = vand.u32 %v425, 3
    %vm427 = vcmp.lt.s32.totalorder %v426, 2
    %vm428 = vcmp.eq.s32.totalorder %v426, 0
    %v429 = vxor.u32 %v423, 2147483648
    %v430 = vsel %vm428, %v422, %v429
    %vm431 = vcmp.eq.s32.totalorder %v426, 2
    %v432 = vxor.u32 %v422, 2147483648
    %v433 = vsel %vm431, %v432, %v423
    %v434 = vsel %vm427, %v430, %v433
    %v435 = vsel %vm424, nan, %v434
    %vm436 = vcmp.eq.f32.partialorder %v40, -1.0
    %vm437 = vcmp.eq.f32.partialorder %v41, -1.0
    %vm438 = vcmp.eq.f32.partialorder %v42, -1.0
    %v439 = vsel %vm436, 1, 0
    %v440 = vsel %vm437, 1, 0
    %v441 = vsel %vm438, 1, 0
    %v442 = vcvt.s32.f32 %v439
    %v443 = vcvt.s32.f32 %v440
    %v444 = vcvt.s32.f32 %v441
    %vm445 = vcmp.eq.f32.partialorder %v40, 0.0
    %vm446 = vcmp.eq.f32.partialorder %v41, 0.0
    %vm447 = vcmp.eq.f32.partialorder %v42, 0.0
    %v448 = vsel %vm445, 1, 0
    %v449 = vsel %vm446, 1, 0
    %v450 = vsel %vm447, 1, 0
    %v451 = vcvt.s32.f32 %v448
    %v452 = vcvt.s32.f32 %v449
    %v453 = vcvt.s32.f32 %v450
    %vm454 = vcmp.eq.f32.partialorder %v40, 1.0
    %vm455 = vcmp.eq.f32.partialorder %v41, 1.0
    %vm456 = vcmp.eq.f32.partialorder %v42, 1.0
    %v457 = vsel %vm454, 1, 0
    %v458 = vsel %vm455, 1, 0
    %v459 = vsel %vm456, 1, 0
    %v460 = vcvt.s32.f32 %v457
    %v461 = vcvt.s32.f32 %v458
    %v462 = vcvt.s32.f32 %v459
    %vm463 = vcmp.eq.f32.partialorder %v40, 2.0
    %vm464 = vcmp.eq.f32.partialorder %v41, 2.0
    %vm465 = vcmp.eq.f32.partialorder %v42, 2.0
    %v466 = vsel %vm463, 1, 0
    %v467 = vsel %vm464, 1, 0
    %v468 = vsel %vm465, 1, 0
    %v469 = vcvt.s32.f32 %v466
    %v470 = vcvt.s32.f32 %v467
    %v471 = vcvt.s32.f32 %v468
    %vm472 = vcmp.eq.f32.partialorder %v40, 3.0
    %vm473 = vcmp.eq.f32.partialorder %v41, 3.0
    %vm474 = vcmp.eq.f32.partialorder %v42, 3.0
    %v475 = vsel %vm472, 1, 0
    %v476 = vsel %vm473, 1, 0
    %v477 = vsel %vm474, 1, 0
    %v478 = vcvt.s32.f32 %v475
    %v479 = vcvt.s32.f32 %v476
    %v480 = vcvt.s32.f32 %v477
    %vm481 = vcmp.eq.f32.partialorder %v40, 4.0
    %vm482 = vcmp.eq.f32.partialorder %v41, 4.0
    %vm483 = vcmp.eq.f32.partialorder %v42, 4.0
    %v484 = vsel %vm481, 1, 0
    %v485 = vsel %vm482, 1, 0
    %v486 = vsel %vm483, 1, 0
    %v487 = vcvt.s32.f32 %v484
    %v488 = vcvt.s32.f32 %v485
    %v489 = vcvt.s32.f32 %v486
    %v490 = vadd.f32 %v451, %v460
    %v491 = vadd.f32 %v452, %v461
    %v492 = vadd.f32 %v453, %v462
    %v493 = vadd.f32 %v490, %v469
    %v494 = vadd.f32 %v491, %v470
    %v495 = vadd.f32 %v492, %v471
    %v496 = vadd.f32 %v493, %v478
    %v497 = vadd.f32 %v494, %v479
    %v498 = vadd.f32 %v495, %v480
    %500 = vset.pattern.permute.xlu0 3
    %501 = vperm.xlu0 %500, %v442
    %v502 = vpop.permute.xlu0 %501
    %505 = vset.pattern.permute.xlu0 3
    %506 = vperm.xlu0 %505, %v443
    %v507 = vpop.permute.xlu0 %506
    %510 = vset.pattern.permute.xlu0 3
    %511 = vperm.xlu0 %510, %v444
    %v512 = vpop.permute.xlu0 %511
    %v514 = vlaneseq
    %v515 = vshrl.u32 %v514, 7
    %v516 = vsub.s32 4, %v515
    %v517 = vrot.slane %v43, %v516
    %v518 = vmul.f32 %v502, %v517
    %v519 = vmul.f32 %v507, %v517
    %v520 = vmul.f32 %v512, %v517
    %522 = vset.pattern.permute.xlu0 3
    %523 = vperm.xlu0 %522, %v451
    %v524 = vpop.permute.xlu0 %523
    %527 = vset.pattern.permute.xlu0 3
    %528 = vperm.xlu0 %527, %v452
    %v529 = vpop.permute.xlu0 %528
    %532 = vset.pattern.permute.xlu0 3
    %533 = vperm.xlu0 %532, %v453
    %v534 = vpop.permute.xlu0 %533
    %v536 = vlaneseq
    %v537 = vshrl.u32 %v536, 7
    %v538 = vsub.s32 5, %v537
    %v539 = vrot.slane %v43, %v538
    %v540 = vmul.f32 %v524, %v539
    %v541 = vmul.f32 %v529, %v539
    %v542 = vmul.f32 %v534, %v539
    %v543 = vadd.f32 %v518, %v540
    %v544 = vadd.f32 %v519, %v541
    %v545 = vadd.f32 %v520, %v542
    %547 = vset.pattern.permute.xlu0 3
    %548 = vperm.xlu0 %547, %v460
    %v549 = vpop.permute.xlu0 %548
    %552 = vset.pattern.permute.xlu0 3
    %553 = vperm.xlu0 %552, %v461
    %v554 = vpop.permute.xlu0 %553
    %557 = vset.pattern.permute.xlu0 3
    %558 = vperm.xlu0 %557, %v462
    %v559 = vpop.permute.xlu0 %558
    %v561 = vlaneseq
    %v562 = vshrl.u32 %v561, 7
    %v563 = vsub.s32 6, %v562
    %v564 = vrot.slane %v43, %v563
    %v565 = vmul.f32 %v549, %v564
    %v566 = vmul.f32 %v554, %v564
    %v567 = vmul.f32 %v559, %v564
    %v568 = vadd.f32 %v543, %v565
    %v569 = vadd.f32 %v544, %v566
    %v570 = vadd.f32 %v545, %v567
    %572 = vset.pattern.permute.xlu0 3
    %573 = vperm.xlu0 %572, %v469
    %v574 = vpop.permute.xlu0 %573
    %577 = vset.pattern.permute.xlu0 3
    %578 = vperm.xlu0 %577, %v470
    %v579 = vpop.permute.xlu0 %578
    %582 = vset.pattern.permute.xlu0 3
    %583 = vperm.xlu0 %582, %v471
    %v584 = vpop.permute.xlu0 %583
    %v586 = vlaneseq
    %v587 = vshrl.u32 %v586, 7
    %v588 = vsub.s32 7, %v587
    %v589 = vrot.slane %v43, %v588
    %v590 = vmul.f32 %v574, %v589
    %v591 = vmul.f32 %v579, %v589
    %v592 = vmul.f32 %v584, %v589
    %v593 = vadd.f32 %v568, %v590
    %v594 = vadd.f32 %v569, %v591
    %v595 = vadd.f32 %v570, %v592
    %597 = vset.pattern.permute.xlu0 3
    %598 = vperm.xlu0 %597, %v478
    %v599 = vpop.permute.xlu0 %598
    %602 = vset.pattern.permute.xlu0 3
    %603 = vperm.xlu0 %602, %v479
    %v604 = vpop.permute.xlu0 %603
    %607 = vset.pattern.permute.xlu0 3
    %608 = vperm.xlu0 %607, %v480
    %v609 = vpop.permute.xlu0 %608
    %v611 = vlaneseq
    %v612 = vshrl.u32 %v611, 7
    %v613 = vsub.s32 0, %v612
    %v614 = vrot.slane %v44, %v613
    %v615 = vmul.f32 %v599, %v614
    %v616 = vmul.f32 %v604, %v614
    %v617 = vmul.f32 %v609, %v614
    %v618 = vadd.f32 %v593, %v615
    %v619 = vadd.f32 %v594, %v616
    %v620 = vadd.f32 %v595, %v617
    %622 = vset.pattern.permute.xlu0 3
    %623 = vperm.xlu0 %622, %v496
    %v624 = vpop.permute.xlu0 %623
    %627 = vset.pattern.permute.xlu0 3
    %628 = vperm.xlu0 %627, %v497
    %v629 = vpop.permute.xlu0 %628
    %632 = vset.pattern.permute.xlu0 3
    %633 = vperm.xlu0 %632, %v498
    %v634 = vpop.permute.xlu0 %633
    %v636 = vmul.f32 %v624, %v227
    %v637 = vmul.f32 %v629, %v331
    %v638 = vmul.f32 %v634, %v435
    %v639 = vadd.f32 %v636, %v618
    %v640 = vadd.f32 %v637, %v619
    %v641 = vadd.f32 %v638, %v620
    %643 = vset.pattern.permute.xlu0 3
    %644 = vperm.xlu0 %643, %v487
    %v645 = vpop.permute.xlu0 %644
    %648 = vset.pattern.permute.xlu0 3
    %649 = vperm.xlu0 %648, %v488
    %v650 = vpop.permute.xlu0 %649
    %653 = vset.pattern.permute.xlu0 3
    %654 = vperm.xlu0 %653, %v489
    %v655 = vpop.permute.xlu0 %654
    %v657 = vmul.f32 %v645, %v40
    %v658 = vmul.f32 %v650, %v41
    %v659 = vmul.f32 %v655, %v42
    %663 = vrot.lane.b32.xlu0 %v657, 64
    %v664 = vpop.permute.xlu0 %663
    %665 = vrot.lane.b32.xlu0 %v658, 64
    %v666 = vpop.permute.xlu0 %665
    %667 = vrot.lane.b32.xlu0 %v659, 64
    %v668 = vpop.permute.xlu0 %667
    %v672 = vadd.f32 %v639, %v664
    %v673 = vadd.f32 %v640, %v666
    %v674 = vadd.f32 %v641, %v668
    %vm675 = vcmask 261120
    %676 = vst.msk [vmem:[#allocation7] sm:$0xff] %vm675, %v672
    %677 = vst.msk [vmem:[#allocation7 + $0x8] sm:$0xff] %vm675, %v673
    %678 = vst.msk [vmem:[#allocation7 + $0x10] sm:$0xff] %vm675, %v674
    // Predicated region
    $region18: #{tpu_custom_call.1} parent=1 // pred_check
      _
    $region19: #{tpu_custom_call.1} parent=1 // pred_check_branch
      %680 = sbr.rel (0) target = $region21
    $region20: #{tpu_custom_call.1} parent=1 // pred_region
      %s682 = ssub.s32 384, 384
      %683 = vsyncadd [#allocation4], %s682
      %s684 = sshll.u32 [#allocation7], 4
      %s685 = int_to_ptr.vmem [resolvable:$true] %s684
      %690 = dma.vmem_to_hbm [thread:$0]  %s685, 384, %s2, [#allocation4], 128, 128, 8
    $region21: #{tpu_custom_call.1} parent=1 // pred_fallthru
      _
    // Predicated region
    $region22: #{tpu_custom_call.1} parent=1 // pred_check
      _
    $region23: #{tpu_custom_call.1} parent=1 // pred_check_branch
      %692 = sbr.rel (0) target = $region25
    $region24: #{tpu_custom_call.1} parent=1 // pred_region
      %693 = dma.done [#allocation4], 384
    $region25: #{tpu_custom_call.1} parent=1 // pred_fallthru
      _
    %694 = vsyncpa [#allocation3], 1
    %695 = vsyncpa [#allocation6], 1
    %696 = vsyncpa [#allocation4], 1

</llo_original>
